<compile_context>
chip_gen: v6e
topology: v6e:2x2x1
jax: 0.10.0
libtpu: 0.0.40
codegen_flags: <defaults>
</compile_context>

<pallas_src>
import jax
import jax.numpy as jnp
from jax.experimental import pallas as pl
from jax.experimental.pallas import tpu as pltpu


def channel_attention_kernel(x_ref, w1t_ref, w2t_ref, o_ref):
    # x_ref / o_ref: (Bt, C, HW)   w1t_ref: (C, Cr)   w2t_ref: (Cr, C)
    x = x_ref[...]                                   # single slab read, input dtype
    bt, _, hw = x.shape

    # Pooled reductions over the spatial (lane) axis. The sum accumulates in
    # f32; max is exact in the input dtype. Only the tiny (Bt, C) pooled path
    # is f32 — no full-slab f32 copy is written back anywhere.
    avg = jnp.sum(x.astype(jnp.float32), axis=-1) * (1.0 / hw)    # (Bt, C) f32
    mx = jnp.max(x, axis=-1).astype(jnp.float32)                  # (Bt, C) f32

    # Stack avg/max along the sublane (row) axis so the two fc() applications
    # become ONE pair of batched matmuls (2*Bt rows) per grid step instead of
    # two nearly-empty MXU round trips per example.
    pooled = jnp.concatenate([avg, mx], axis=0)                   # (2*Bt, C)

    w1t = w1t_ref[...].astype(jnp.float32)                        # (C, Cr)
    w2t = w2t_ref[...].astype(jnp.float32)                        # (Cr, C)

    h = jnp.maximum(
        jnp.dot(pooled, w1t, preferred_element_type=jnp.float32), 0.0)   # (2*Bt, Cr)
    s = jax.nn.sigmoid(
        jnp.dot(h, w2t, preferred_element_type=jnp.float32))             # (2*Bt, C)

    # fc(avg)*x + fc(max)*x == (fc(avg) + fc(max)) * x  — one multiply pass,
    # performed in the input dtype so bf16 slabs stay bf16 on the VPU/store.
    scale = (s[:bt] + s[bt:]).astype(x.dtype)                     # (Bt, C)
    o_ref[...] = (scale[:, :, None] * x).astype(o_ref.dtype)


def _vmem_capacity_bytes():
    """Per-generation VMEM capacity (128 MiB v5e/v6e, 64 MiB v7x); safe fallback."""
    try:
        info = pltpu.get_tpu_info()
        cap = getattr(info, "vmem_capacity_bytes", None)
        if cap:
            return int(cap)
    except Exception:
        pass
    return 64 * 1024 * 1024  # conservative default (v7x-sized)


def _pick_batch_tile(batch, per_batch_bytes, target_block_bytes):
    """Largest divisor of `batch` whose x-block stays under the target size."""
    cap = max(1, target_block_bytes // max(per_batch_bytes, 1))
    bt = max(1, min(batch, cap))
    while batch % bt:
        bt -= 1
    return bt


def channel_attention(x, w1, w2, *, target_block_bytes=None):
    """ChannelAttention forward.

    x:  (B, C, H, W) NCHW input.
    w1: (Cr, C)  squeezed Conv2d(C, Cr, 1, bias=False) weight.
    w2: (C, Cr)  squeezed Conv2d(Cr, C, 1, bias=False) weight.
    Returns (B, C, H, W) with x.dtype.
    """
    B, C, H, W = x.shape
    Cr = w1.shape[0]
    HW = H * W
    x_flat = x.reshape(B, C, HW)

    # Pre-transpose the 1x1-conv weights so the in-kernel matmuls are
    # (2Bt, C) @ (C, Cr) and (2Bt, Cr) @ (Cr, C) with no in-kernel relayout.
    w1t = jnp.transpose(w1)   # (C, Cr)
    w2t = jnp.transpose(w2)   # (Cr, C)

    itemsize = jnp.dtype(x.dtype).itemsize
    per_batch_bytes = C * HW * itemsize

    vmem_cap = _vmem_capacity_bytes()
    if target_block_bytes is None:
        # ~4 MiB blocks on v7x (64 MiB VMEM), ~8 MiB on v5e/v6e (128 MiB VMEM).
        # in + out double buffering keeps ~4 blocks resident, so this stays
        # well inside the per-generation budget while amortizing the ~0.35 us
        # per-grid-step pipeline overhead.
        target_block_bytes = max(
            per_batch_bytes,
            min(8 * 1024 * 1024, max(2 * 1024 * 1024, vmem_cap // 16)),
        )
    bt = _pick_batch_tile(B, per_batch_bytes, target_block_bytes)
    block_bytes = bt * per_batch_bytes

    # TODO(synk): if a single (C, HW) slab ever exceeds the VMEM budget (very
    # large feature maps), switch to a two-pass structure: pass 1 tiles HW on
    # an "arbitrary" reduction axis accumulating avg/max into scratch, pass 2
    # applies the per-channel scale elementwise.

    # Explicit scoped-VMEM limit (don't rely on the 16/32 MiB default),
    # clamped below physical capacity on every generation.
    needed = 4 * block_bytes + (1 << 20)
    vmem_limit = int(min(max(needed, 32 * 1024 * 1024), vmem_cap * 3 // 4))

    grid = (B // bt,)

    out_flat = pl.pallas_call(
        channel_attention_kernel,
        out_shape=jax.ShapeDtypeStruct((B, C, HW), x.dtype),
        grid_spec=pltpu.PrefetchScalarGridSpec(
            num_scalar_prefetch=0,
            grid=grid,
            in_specs=[
                pl.BlockSpec((bt, C, HW), lambda b: (b, 0, 0)),
                # Constant index_maps: weight blocks stay VMEM-resident, no
                # per-step re-DMA.
                pl.BlockSpec((C, Cr), lambda b: (0, 0)),
                pl.BlockSpec((Cr, C), lambda b: (0, 0)),
            ],
            out_specs=pl.BlockSpec((bt, C, HW), lambda b: (b, 0, 0)),
        ),
        compiler_params=pltpu.CompilerParams(
            dimension_semantics=("parallel",),
            vmem_limit_bytes=vmem_limit,
        ),
    )(x_flat, w1t, w2t)

    return out_flat.reshape(B, C, H, W)


def reference(x, w1, w2):
    # Pure-JAX reference mirroring the PyTorch ChannelAttention.forward.
    avg = jnp.mean(x, axis=(2, 3), keepdims=True)   # (B, C, 1, 1)
    mx = jnp.max(x, axis=(2, 3), keepdims=True)     # (B, C, 1, 1)

    def fc(v):  # 1x1 convs on a (B, C, 1, 1) tensor == per-channel linear
        vb = v[:, :, 0, 0]                           # (B, C)
        h = jnp.maximum(vb @ w1.T, 0.0)              # (B, Cr)
        s = jax.nn.sigmoid(h @ w2.T)                 # (B, C)
        return s[:, :, None, None]

    return fc(avg) * x + fc(mx) * x


if __name__ == "__main__":
    key = jax.random.PRNGKey(0)
    kx, k1, k2 = jax.random.split(key, 3)

    # HW = 256 -> the lane (last) axis is a multiple of 128, so loads/stores
    # are lane-dense (no masked vst.msk partial stores).
    B, C, H, W = 4, 32, 16, 16
    reduction_ratio = 16
    Cr = C // reduction_ratio  # 2

    x = jax.random.normal(kx, (B, C, H, W), dtype=jnp.float32)
    # Conv2d(C, Cr, 1, bias=False).weight has shape (Cr, C, 1, 1); squeeze -> (Cr, C).
    w1 = jax.random.normal(k1, (Cr, C), dtype=jnp.float32) * (1.0 / jnp.sqrt(C))
    # Conv2d(Cr, C, 1, bias=False).weight -> (C, Cr).
    w2 = jax.random.normal(k2, (C, Cr), dtype=jnp.float32) * (1.0 / jnp.sqrt(Cr))

    ref = reference(x, w1, w2)

    # 1) Default tiling: whole batch fits one block (grid=(1,)).
    out = jax.block_until_ready(channel_attention(x, w1, w2))
    assert out.shape == (B, C, H, W)
    assert jnp.allclose(out, ref, atol=1e-5, rtol=1e-5), "mismatch vs reference (default tiling)"

    # 2) Force a small block budget so the batch is split across grid steps
    #    (exercises the multi-step batched-tile path: Bt=2, grid=(2,)).
    out2 = jax.block_until_ready(
        channel_attention(x, w1, w2, target_block_bytes=2 * C * H * W * 4))
    assert jnp.allclose(out2, ref, atol=1e-5, rtol=1e-5), "mismatch vs reference (tiled batch)"

    # 3) bf16 inputs: pooling accumulates in f32, multiply/store stay in bf16.
    xb = x.astype(jnp.bfloat16)
    outb = jax.block_until_ready(channel_attention(xb, w1, w2))
    refb = reference(xb.astype(jnp.float32), w1, w2)
    assert jnp.allclose(outb.astype(jnp.float32), refb, atol=3e-2, rtol=3e-2), "mismatch vs reference (bf16)"

    print("KERNEL_OK")
</pallas_src>

<mosaic_0001>
module attributes {stable_mosaic.version = 11 : i64} {
  func.func @channel_attention_kernel(%arg0: i32, %arg1: memref<4x32x256xf32, #tpu.memory_space<vmem>>, %arg2: memref<32x2xf32, #tpu.memory_space<vmem>>, %arg3: memref<2x32xf32, #tpu.memory_space<vmem>>, %arg4: memref<4x32x256xf32, #tpu.memory_space<vmem>>) attributes {dimension_semantics = [#tpu.dimension_semantics<parallel>], iteration_bounds = array<i64: 1>, scalar_prefetch = 0 : i64, scratch_operands = 0 : i64, tpu.core_type = #tpu.core_type<tc>, window_params = [{transform_indices = @transform_0, window_bounds = array<i64: 4, 32, 256>}, {pipeline_mode = #tpu.pipeline_mode<synchronous>, transform_indices = @transform_1, window_bounds = array<i64: 32, 2>}, {pipeline_mode = #tpu.pipeline_mode<synchronous>, transform_indices = @transform_2, window_bounds = array<i64: 2, 32>}, {transform_indices = @transform_3, window_bounds = array<i64: 4, 32, 256>}]} {
    %c0 = arith.constant 0 : index
    %c0_0 = arith.constant 0 : index
    %c0_1 = arith.constant 0 : index
    %0 = vector.load %arg1[%c0, %c0_0, %c0_1] : memref<4x32x256xf32, #tpu.memory_space<vmem>>, vector<4x32x256xf32>
    %cst = arith.constant dense<0.000000e+00> : vector<4x32xf32>
    %1 = vector.multi_reduction <add>, %0, %cst [2] : vector<4x32x256xf32> to vector<4x32xf32>
    %cst_2 = arith.constant 3.906250e-03 : f32
    %2 = vector.broadcast %cst_2 : f32 to vector<4x32xf32>
    %3 = arith.mulf %1, %2 : vector<4x32xf32>
    %cst_3 = arith.constant dense<0xFF800000> : vector<4x32xf32>
    %4 = vector.multi_reduction <maximumf>, %0, %cst_3 [2] : vector<4x32x256xf32> to vector<4x32xf32>
    %5 = tpu.concatenate %3, %4 in 0 : vector<4x32xf32>, vector<4x32xf32> -> vector<8x32xf32>
    %c0_4 = arith.constant 0 : index
    %c0_5 = arith.constant 0 : index
    %6 = vector.load %arg2[%c0_4, %c0_5] : memref<32x2xf32, #tpu.memory_space<vmem>>, vector<32x2xf32>
    %c0_6 = arith.constant 0 : index
    %c0_7 = arith.constant 0 : index
    %7 = vector.load %arg3[%c0_6, %c0_7] : memref<2x32xf32, #tpu.memory_space<vmem>>, vector<2x32xf32>
    %cst_8 = arith.constant dense<0.000000e+00> : vector<8x2xf32>
    %8 = tpu.matmul %5, %6, %cst_8 {dimension_numbers = #tpu.dot_dimension_numbers<[1], [0], [0], [1], [0, 0, 1, 1], [], []>} : vector<8x32xf32>, vector<32x2xf32>, vector<8x2xf32> -> vector<8x2xf32>
    %cst_9 = arith.constant 0.000000e+00 : f32
    %9 = vector.broadcast %cst_9 : f32 to vector<8x2xf32>
    %10 = arith.maximumf %8, %9 : vector<8x2xf32>
    %cst_10 = arith.constant dense<0.000000e+00> : vector<8x32xf32>
    %11 = tpu.matmul %10, %7, %cst_10 {dimension_numbers = #tpu.dot_dimension_numbers<[1], [0], [0], [1], [0, 0, 1, 1], [], []>} : vector<8x2xf32>, vector<2x32xf32>, vector<8x32xf32> -> vector<8x32xf32>
    %12 = arith.negf %11 : vector<8x32xf32>
    %13 = math.exp %12 : vector<8x32xf32>
    %cst_11 = arith.constant 1.000000e+00 : f32
    %14 = vector.broadcast %cst_11 : f32 to vector<8x32xf32>
    %15 = arith.addf %14, %13 : vector<8x32xf32>
    %16 = arith.divf %14, %15 : vector<8x32xf32>
    %17 = vector.extract_strided_slice %16 {offsets = [0, 0], sizes = [4, 32], strides = [1, 1]} : vector<8x32xf32> to vector<4x32xf32>
    %18 = vector.extract_strided_slice %16 {offsets = [4, 0], sizes = [4, 32], strides = [1, 1]} : vector<8x32xf32> to vector<4x32xf32>
    %19 = arith.addf %17, %18 : vector<4x32xf32>
    %20 = vector.shape_cast %19 : vector<4x32xf32> to vector<4x32x1xf32>
    %21 = vector.broadcast %20 : vector<4x32x1xf32> to vector<4x32x256xf32>
    %22 = arith.mulf %21, %0 : vector<4x32x256xf32>
    %c0_12 = arith.constant 0 : index
    %c0_13 = arith.constant 0 : index
    %c0_14 = arith.constant 0 : index
    %23 = vector.load %arg4[%c0_12, %c0_13, %c0_14] : memref<4x32x256xf32, #tpu.memory_space<vmem>>, vector<4x32x256xf32>
    tpu.vector_store %arg4[%c0_12, %c0_13, %c0_14], %22 {strides = array<i32>} : memref<4x32x256xf32, #tpu.memory_space<vmem>>, vector<4x32x256xf32>,
    return
  }
  func.func @transform_0(%arg0: i32) -> (i32, i32, i32) {
    %c0_i32 = arith.constant 0 : i32
    %c0_i32_0 = arith.constant 0 : i32
    %c0_i32_1 = arith.constant 0 : i32
    return %arg0, %c0_i32, %c0_i32_0 : i32, i32, i32
  }
  func.func @transform_1(%arg0: i32) -> (i32, i32) {
    %c0_i32 = arith.constant 0 : i32
    %c0_i32_0 = arith.constant 0 : i32
    %c0_i32_1 = arith.constant 0 : i32
    return %c0_i32, %c0_i32_0 : i32, i32
  }
  func.func @transform_2(%arg0: i32) -> (i32, i32) {
    %c0_i32 = arith.constant 0 : i32
    %c0_i32_0 = arith.constant 0 : i32
    %c0_i32_1 = arith.constant 0 : i32
    return %c0_i32, %c0_i32_0 : i32, i32
  }
  func.func @transform_3(%arg0: i32) -> (i32, i32, i32) {
    %c0_i32 = arith.constant 0 : i32
    %c0_i32_0 = arith.constant 0 : i32
    %c0_i32_1 = arith.constant 0 : i32
    return %arg0, %c0_i32, %c0_i32_0 : i32, i32, i32
  }
}

</mosaic_0001>

<llo_original>
// kernel: tpu_custom_call.1
$region0: #{tpu_custom_call.1}
  #allocation0 [shape = 'u32[]', space=smem, size = 0x4, offset = 0x4, fixed_abs, tag = 'smem constant byte address 0x4 - core index']
  #allocation1 [shape = 'u32[144,128]{1,0:T(1,128)}', space=vmem, size = 0x12000, scoped, tag = 'internal scratch']
  %s0 = inlined_call_operand.hbm [shape: f32[4,32,256], index: 0, kind: input, shape index: {}]
  %s1 = inlined_call_operand.vmem [shape: f32[32,2], index: 1, kind: input, shape index: {}]
  %s2 = inlined_call_operand.vmem [shape: f32[2,32], index: 2, kind: input, shape index: {}]
  %s3 = inlined_call_operand.hbm [shape: f32[4,32,256], index: 3, kind: output, shape index: {}]
  %s4 = sld [smem:[#allocation0]]
  $region26: #{tpu_custom_call.1} parent=0
    _
  %s6 = ssub.s32 1, %s4
  %s7 = scalar_select 0, %s6, %s4
  $region1: #{tpu_custom_call.1} parent=0
    #allocation2 [shape = 'u8[131072]{0}', space=vmem, size = 0x20000, scoped, tag = 'input window, operand 0, single buffered']
    #allocation3 [shape = 's32[1]{0}', space=sflag, size = 0x4, scoped, tag = 'scoped memory for tpu_custom_call.1']
    #allocation4 [shape = 's32[1]{0}', space=sflag, size = 0x4, scoped, tag = 'scoped memory for tpu_custom_call.1']
    #allocation5 [shape = 'u8[131072]{0}', space=vmem, size = 0x20000, scoped, tag = 'output window, operand 0, single buffered']
    %8 = vsyncpa [#allocation3], 0
    %9 = vsyncpa [#allocation4], 0
    // Predicated region
    $region2: #{tpu_custom_call.1} parent=1 // pred_check
      _
    $region3: #{tpu_custom_call.1} parent=1 // pred_check_branch
      %11 = sbr.rel (0) target = $region5
    $region4: #{tpu_custom_call.1} parent=1 // pred_region
      %s13 = ssub.s32 4096, 4096
      %14 = vsyncadd [#allocation3], %s13
      %s15 = sshll.u32 [#allocation2], 4
      %s16 = int_to_ptr.vmem [resolvable:$true] %s15
      %21 = dma.hbm_to_vmem [thread:$0]  %s0, 4096, %s16, [#allocation3], 256, 256, 16
    $region5: #{tpu_custom_call.1} parent=1 // pred_fallthru
      _
    // Predicated region
    $region6: #{tpu_custom_call.1} parent=1 // pred_check
      _
    $region7: #{tpu_custom_call.1} parent=1 // pred_check_branch
      %23 = sbr.rel (0) target = $region9
    $region8: #{tpu_custom_call.1} parent=1 // pred_region
      _
    $region9: #{tpu_custom_call.1} parent=1 // pred_fallthru
      _
    // Predicated region
    $region10: #{tpu_custom_call.1} parent=1 // pred_check
      _
    $region11: #{tpu_custom_call.1} parent=1 // pred_check_branch
      %25 = sbr.rel (0) target = $region13
    $region12: #{tpu_custom_call.1} parent=1 // pred_region
      _
    $region13: #{tpu_custom_call.1} parent=1 // pred_fallthru
      _
    // Predicated region
    $region14: #{tpu_custom_call.1} parent=1 // pred_check
      _
    $region15: #{tpu_custom_call.1} parent=1 // pred_check_branch
      %27 = sbr.rel (0) target = $region17
    $region16: #{tpu_custom_call.1} parent=1 // pred_region
      %28 = dma.done [#allocation3], 4096
    $region17: #{tpu_custom_call.1} parent=1 // pred_fallthru
      _
    %v29 = vld [vmem:[#allocation2] sm:$0xff]
    %v30 = vld [vmem:[#allocation2 + $0x8] sm:$0xff]
    %v31 = vld [vmem:[#allocation2 + $0x10] sm:$0xff]
    %v32 = vld [vmem:[#allocation2 + $0x18] sm:$0xff]
    %v33 = vld [vmem:[#allocation2 + $0x20] sm:$0xff]
    %v34 = vld [vmem:[#allocation2 + $0x28] sm:$0xff]
    %v35 = vld [vmem:[#allocation2 + $0x30] sm:$0xff]
    %v36 = vld [vmem:[#allocation2 + $0x38] sm:$0xff]
    %v37 = vld [vmem:[#allocation2 + $0x40] sm:$0xff]
    %v38 = vld [vmem:[#allocation2 + $0x48] sm:$0xff]
    %v39 = vld [vmem:[#allocation2 + $0x50] sm:$0xff]
    %v40 = vld [vmem:[#allocation2 + $0x58] sm:$0xff]
    %v41 = vld [vmem:[#allocation2 + $0x60] sm:$0xff]
    %v42 = vld [vmem:[#allocation2 + $0x68] sm:$0xff]
    %v43 = vld [vmem:[#allocation2 + $0x70] sm:$0xff]
    %v44 = vld [vmem:[#allocation2 + $0x78] sm:$0xff]
    %v45 = vld [vmem:[#allocation2 + $0x80] sm:$0xff]
    %v46 = vld [vmem:[#allocation2 + $0x88] sm:$0xff]
    %v47 = vld [vmem:[#allocation2 + $0x90] sm:$0xff]
    %v48 = vld [vmem:[#allocation2 + $0x98] sm:$0xff]
    %v49 = vld [vmem:[#allocation2 + $0xa0] sm:$0xff]
    %v50 = vld [vmem:[#allocation2 + $0xa8] sm:$0xff]
    %v51 = vld [vmem:[#allocation2 + $0xb0] sm:$0xff]
    %v52 = vld [vmem:[#allocation2 + $0xb8] sm:$0xff]
    %v53 = vld [vmem:[#allocation2 + $0xc0] sm:$0xff]
    %v54 = vld [vmem:[#allocation2 + $0xc8] sm:$0xff]
    %v55 = vld [vmem:[#allocation2 + $0xd0] sm:$0xff]
    %v56 = vld [vmem:[#allocation2 + $0xd8] sm:$0xff]
    %v57 = vld [vmem:[#allocation2 + $0xe0] sm:$0xff]
    %v58 = vld [vmem:[#allocation2 + $0xe8] sm:$0xff]
    %v59 = vld [vmem:[#allocation2 + $0xf0] sm:$0xff]
    %v60 = vld [vmem:[#allocation2 + $0xf8] sm:$0xff]
    %v61 = vadd.f32 %v29, %v30
    %62 = vadd.xlane.f32.xlu0 %v61
    %v63 = vpop.xlane.xlu0 %62
    %v64 = vadd.f32 %v31, %v32
    %65 = vadd.xlane.f32.xlu0 %v64
    %v66 = vpop.xlane.xlu0 %65
    %v67 = vadd.f32 %v33, %v34
    %68 = vadd.xlane.f32.xlu0 %v67
    %v69 = vpop.xlane.xlu0 %68
    %v70 = vadd.f32 %v35, %v36
    %71 = vadd.xlane.f32.xlu0 %v70
    %v72 = vpop.xlane.xlu0 %71
    %v73 = vadd.f32 %v37, %v38
    %74 = vadd.xlane.f32.xlu0 %v73
    %v75 = vpop.xlane.xlu0 %74
    %v76 = vadd.f32 %v39, %v40
    %77 = vadd.xlane.f32.xlu0 %v76
    %v78 = vpop.xlane.xlu0 %77
    %v79 = vadd.f32 %v41, %v42
    %80 = vadd.xlane.f32.xlu0 %v79
    %v81 = vpop.xlane.xlu0 %80
    %v82 = vadd.f32 %v43, %v44
    %83 = vadd.xlane.f32.xlu0 %v82
    %v84 = vpop.xlane.xlu0 %83
    %v85 = vadd.f32 %v45, %v46
    %86 = vadd.xlane.f32.xlu0 %v85
    %v87 = vpop.xlane.xlu0 %86
    %v88 = vadd.f32 %v47, %v48
    %89 = vadd.xlane.f32.xlu0 %v88
    %v90 = vpop.xlane.xlu0 %89
    %v91 = vadd.f32 %v49, %v50
    %92 = vadd.xlane.f32.xlu0 %v91
    %v93 = vpop.xlane.xlu0 %92
    %v94 = vadd.f32 %v51, %v52
    %95 = vadd.xlane.f32.xlu0 %v94
    %v96 = vpop.xlane.xlu0 %95
    %v97 = vadd.f32 %v53, %v54
    %98 = vadd.xlane.f32.xlu0 %v97
    %v99 = vpop.xlane.xlu0 %98
    %v100 = vadd.f32 %v55, %v56
    %101 = vadd.xlane.f32.xlu0 %v100
    %v102 = vpop.xlane.xlu0 %101
    %v103 = vadd.f32 %v57, %v58
    %104 = vadd.xlane.f32.xlu0 %v103
    %v105 = vpop.xlane.xlu0 %104
    %v106 = vadd.f32 %v59, %v60
    %107 = vadd.xlane.f32.xlu0 %v106
    %v108 = vpop.xlane.xlu0 %107
    %v109 = vmul.f32 %v63, 0.00390625
    %v110 = vmul.f32 %v66, 0.00390625
    %v111 = vmul.f32 %v69, 0.00390625
    %v112 = vmul.f32 %v72, 0.00390625
    %v113 = vmul.f32 %v75, 0.00390625
    %v114 = vmul.f32 %v78, 0.00390625
    %v115 = vmul.f32 %v81, 0.00390625
    %v116 = vmul.f32 %v84, 0.00390625
    %v117 = vmul.f32 %v87, 0.00390625
    %v118 = vmul.f32 %v90, 0.00390625
    %v119 = vmul.f32 %v93, 0.00390625
    %v120 = vmul.f32 %v96, 0.00390625
    %v121 = vmul.f32 %v99, 0.00390625
    %v122 = vmul.f32 %v102, 0.00390625
    %v123 = vmul.f32 %v105, 0.00390625
    %v124 = vmul.f32 %v108, 0.00390625
    %v125 = vmax.f32 %v29, %v30
    %126 = vmax.xlane.f32.xlu0 %v125
    %v127 = vpop.xlane.xlu0 %126
    %v128 = vmax.f32 %v31, %v32
    %129 = vmax.xlane.f32.xlu0 %v128
    %v130 = vpop.xlane.xlu0 %129
    %v131 = vmax.f32 %v33, %v34
    %132 = vmax.xlane.f32.xlu0 %v131
    %v133 = vpop.xlane.xlu0 %132
    %v134 = vmax.f32 %v35, %v36
    %135 = vmax.xlane.f32.xlu0 %v134
    %v136 = vpop.xlane.xlu0 %135
    %v137 = vmax.f32 %v37, %v38
    %138 = vmax.xlane.f32.xlu0 %v137
    %v139 = vpop.xlane.xlu0 %138
    %v140 = vmax.f32 %v39, %v40
    %141 = vmax.xlane.f32.xlu0 %v140
    %v142 = vpop.xlane.xlu0 %141
    %v143 = vmax.f32 %v41, %v42
    %144 = vmax.xlane.f32.xlu0 %v143
    %v145 = vpop.xlane.xlu0 %144
    %v146 = vmax.f32 %v43, %v44
    %147 = vmax.xlane.f32.xlu0 %v146
    %v148 = vpop.xlane.xlu0 %147
    %v149 = vmax.f32 %v45, %v46
    %150 = vmax.xlane.f32.xlu0 %v149
    %v151 = vpop.xlane.xlu0 %150
    %v152 = vmax.f32 %v47, %v48
    %153 = vmax.xlane.f32.xlu0 %v152
    %v154 = vpop.xlane.xlu0 %153
    %v155 = vmax.f32 %v49, %v50
    %156 = vmax.xlane.f32.xlu0 %v155
    %v157 = vpop.xlane.xlu0 %156
    %v158 = vmax.f32 %v51, %v52
    %159 = vmax.xlane.f32.xlu0 %v158
    %v160 = vpop.xlane.xlu0 %159
    %v161 = vmax.f32 %v53, %v54
    %162 = vmax.xlane.f32.xlu0 %v161
    %v163 = vpop.xlane.xlu0 %162
    %v164 = vmax.f32 %v55, %v56
    %165 = vmax.xlane.f32.xlu0 %v164
    %v166 = vpop.xlane.xlu0 %165
    %v167 = vmax.f32 %v57, %v58
    %168 = vmax.xlane.f32.xlu0 %v167
    %v169 = vpop.xlane.xlu0 %168
    %v170 = vmax.f32 %v59, %v60
    %171 = vmax.xlane.f32.xlu0 %v170
    %v172 = vpop.xlane.xlu0 %171
    %v189 = vlaneseq
    %v190 = vand.u32 %v189, 127
    %v191 = vlaneseq
    %v192 = vshrl.u32 %v191, 7
    %v193 = vsub.s32 %v190, %v192
    %v194 = vrot.slane %v109, %v193
    %v195 = vadd.s32 %v190, 4294967288
    %v196 = vlaneseq
    %v197 = vshrl.u32 %v196, 7
    %v198 = vsub.s32 %v195, %v197
    %v199 = vrot.slane %v110, %v198
    %vm200 = vcmask 130112
    %v201 = vsel %vm200, %v199, %v194
    %v202 = vadd.s32 %v190, 4294967280
    %v203 = vlaneseq
    %v204 = vshrl.u32 %v203, 7
    %v205 = vsub.s32 %v202, %v204
    %v206 = vrot.slane %v111, %v205
    %vm207 = vcmask 195712
    %v208 = vsel %vm207, %v206, %v201
    %v209 = vadd.s32 %v190, 4294967272
    %v210 = vlaneseq
    %v211 = vshrl.u32 %v210, 7
    %v212 = vsub.s32 %v209, %v211
    %v213 = vrot.slane %v112, %v212
    %vm214 = vcmask 261312
    %v215 = vsel %vm214, %v213, %v208
    %v216 = vlaneseq
    %v217 = vshrl.u32 %v216, 7
    %v218 = vsub.s32 %v190, %v217
    %v219 = vrot.slane %v113, %v218
    %v220 = vlaneseq
    %v221 = vshrl.u32 %v220, 7
    %v222 = vsub.s32 %v195, %v221
    %v223 = vrot.slane %v114, %v222
    %v224 = vsel %vm200, %v223, %v219
    %v225 = vlaneseq
    %v226 = vshrl.u32 %v225, 7
    %v227 = vsub.s32 %v202, %v226
    %v228 = vrot.slane %v115, %v227
    %v229 = vsel %vm207, %v228, %v224
    %v230 = vlaneseq
    %v231 = vshrl.u32 %v230, 7
    %v232 = vsub.s32 %v209, %v231
    %v233 = vrot.slane %v116, %v232
    %v234 = vsel %vm214, %v233, %v229
    %v235 = vlaneseq
    %v236 = vshrl.u32 %v235, 7
    %v237 = vsub.s32 %v190, %v236
    %v238 = vrot.slane %v117, %v237
    %v239 = vlaneseq
    %v240 = vshrl.u32 %v239, 7
    %v241 = vsub.s32 %v195, %v240
    %v242 = vrot.slane %v118, %v241
    %v243 = vsel %vm200, %v242, %v238
    %v244 = vlaneseq
    %v245 = vshrl.u32 %v244, 7
    %v246 = vsub.s32 %v202, %v245
    %v247 = vrot.slane %v119, %v246
    %v248 = vsel %vm207, %v247, %v243
    %v249 = vlaneseq
    %v250 = vshrl.u32 %v249, 7
    %v251 = vsub.s32 %v209, %v250
    %v252 = vrot.slane %v120, %v251
    %v253 = vsel %vm214, %v252, %v248
    %v254 = vlaneseq
    %v255 = vshrl.u32 %v254, 7
    %v256 = vsub.s32 %v190, %v255
    %v257 = vrot.slane %v121, %v256
    %v258 = vlaneseq
    %v259 = vshrl.u32 %v258, 7
    %v260 = vsub.s32 %v195, %v259
    %v261 = vrot.slane %v122, %v260
    %v262 = vsel %vm200, %v261, %v257
    %v263 = vlaneseq
    %v264 = vshrl.u32 %v263, 7
    %v265 = vsub.s32 %v202, %v264
    %v266 = vrot.slane %v123, %v265
    %v267 = vsel %vm207, %v266, %v262
    %v268 = vlaneseq
    %v269 = vshrl.u32 %v268, 7
    %v270 = vsub.s32 %v209, %v269
    %v271 = vrot.slane %v124, %v270
    %v272 = vsel %vm214, %v271, %v267
    %vm273 = vcmask 1041409
    %v274 = vsel %vm273, %v234, %v215
    %vm275 = vcmask 1042434
    %v276 = vsel %vm275, %v253, %v274
    %vm277 = vcmask 1043459
    %v278 = vsel %vm277, %v272, %v276
    %v296 = vlaneseq
    %v297 = vshrl.u32 %v296, 7
    %v298 = vsub.s32 %v190, %v297
    %v299 = vrot.slane %v127, %v298
    %v300 = vlaneseq
    %v301 = vshrl.u32 %v300, 7
    %v302 = vsub.s32 %v195, %v301
    %v303 = vrot.slane %v130, %v302
    %v304 = vsel %vm200, %v303, %v299
    %v305 = vlaneseq
    %v306 = vshrl.u32 %v305, 7
    %v307 = vsub.s32 %v202, %v306
    %v308 = vrot.slane %v133, %v307
    %v309 = vsel %vm207, %v308, %v304
    %v310 = vlaneseq
    %v311 = vshrl.u32 %v310, 7
    %v312 = vsub.s32 %v209, %v311
    %v313 = vrot.slane %v136, %v312
    %v314 = vsel %vm214, %v313, %v309
    %v315 = vlaneseq
    %v316 = vshrl.u32 %v315, 7
    %v317 = vsub.s32 %v190, %v316
    %v318 = vrot.slane %v139, %v317
    %v319 = vlaneseq
    %v320 = vshrl.u32 %v319, 7
    %v321 = vsub.s32 %v195, %v320
    %v322 = vrot.slane %v142, %v321
    %v323 = vsel %vm200, %v322, %v318
    %v324 = vlaneseq
    %v325 = vshrl.u32 %v324, 7
    %v326 = vsub.s32 %v202, %v325
    %v327 = vrot.slane %v145, %v326
    %v328 = vsel %vm207, %v327, %v323
    %v329 = vlaneseq
    %v330 = vshrl.u32 %v329, 7
    %v331 = vsub.s32 %v209, %v330
    %v332 = vrot.slane %v148, %v331
    %v333 = vsel %vm214, %v332, %v328
    %v334 = vlaneseq
    %v335 = vshrl.u32 %v334, 7
    %v336 = vsub.s32 %v190, %v335
    %v337 = vrot.slane %v151, %v336
    %v338 = vlaneseq
    %v339 = vshrl.u32 %v338, 7
    %v340 = vsub.s32 %v195, %v339
    %v341 = vrot.slane %v154, %v340
    %v342 = vsel %vm200, %v341, %v337
    %v343 = vlaneseq
    %v344 = vshrl.u32 %v343, 7
    %v345 = vsub.s32 %v202, %v344
    %v346 = vrot.slane %v157, %v345
    %v347 = vsel %vm207, %v346, %v342
    %v348 = vlaneseq
    %v349 = vshrl.u32 %v348, 7
    %v350 = vsub.s32 %v209, %v349
    %v351 = vrot.slane %v160, %v350
    %v352 = vsel %vm214, %v351, %v347
    %v353 = vlaneseq
    %v354 = vshrl.u32 %v353, 7
    %v355 = vsub.s32 %v190, %v354
    %v356 = vrot.slane %v163, %v355
    %v357 = vlaneseq
    %v358 = vshrl.u32 %v357, 7
    %v359 = vsub.s32 %v195, %v358
    %v360 = vrot.slane %v166, %v359
    %v361 = vsel %vm200, %v360, %v356
    %v362 = vlaneseq
    %v363 = vshrl.u32 %v362, 7
    %v364 = vsub.s32 %v202, %v363
    %v365 = vrot.slane %v169, %v364
    %v366 = vsel %vm207, %v365, %v361
    %v367 = vlaneseq
    %v368 = vshrl.u32 %v367, 7
    %v369 = vsub.s32 %v209, %v368
    %v370 = vrot.slane %v172, %v369
    %v371 = vsel %vm214, %v370, %v366
    %vm372 = vcmask 1045509
    %v373 = vsel %vm372, %v333, %v314
    %vm374 = vcmask 1046534
    %v375 = vsel %vm374, %v352, %v373
    %vm376 = vcmask 1047559
    %v377 = vsel %vm376, %v371, %v375
    %vm379 = vcmask 1043456
    %v380 = vsel %vm379, %v278, %v377
    %v381 = vld [vmem:[%s1] sm:$0xff]
    %v382 = vld [vmem:[%s1 + $0x8] sm:$0xff]
    %v383 = vld [vmem:[%s1 + $0x10] sm:$0xff]
    %v384 = vld [vmem:[%s1 + $0x18] sm:$0xff]
    %v385 = vld [vmem:[%s2] sm:$0x3]
    %vm386 = vcmask 261120
    %v388 = vsel %vm386, %v380, 0
    %390 = vmatprep.subr.mxu0 0.0
    %391 = vmatpush1.msra.mxu0 0.0
    %392 = vmatprep.subr.mxu0 0.0
    %393 = vmatpush1.msra.mxu0 0.0
    %394 = vmatprep.subr.mxu0 0.0
    %395 = vmatpush1.msra.mxu0 0.0
    %396 = vmatprep.subr.mxu0 0.0
    %397 = vmatpush1.msra.mxu0 0.0
    %398 = vmatprep.subr.mxu0 0.0
    %399 = vmatpush1.msra.mxu0 0.0
    %400 = vmatprep.subr.mxu0 0.0
    %401 = vmatpush1.msra.mxu0 0.0
    %402 = vmatprep.subr.mxu0 0.0
    %403 = vmatpush1.msra.mxu0 0.0
    %404 = vmatprep.subr.mxu0 0.0
    %405 = vmatpush1.msra.mxu0 0.0
    %406 = vmatprep.subr.mxu0 0.0
    %407 = vmatpush1.msra.mxu0 0.0
    %408 = vmatprep.subr.mxu0 0.0
    %409 = vmatpush1.msra.mxu0 0.0
    %410 = vmatprep.subr.mxu0 0.0
    %411 = vmatpush1.msra.mxu0 0.0
    %412 = vmatprep.subr.mxu0 0.0
    %413 = vmatpush1.msra.mxu0 0.0
    %414 = vmatprep.subr.mxu0 0.0
    %415 = vmatpush1.msra.mxu0 %v384
    %416 = vmatprep.subr.mxu0 0.0
    %417 = vmatpush1.msra.mxu0 %v383
    %418 = vmatprep.subr.mxu0 0.0
    %419 = vmatpush1.msra.mxu0 %v382
    %420 = vmatprep.subr.mxu0 0.0
    %421 = vmatpush1.msra.mxu0 %v381
    %422 = vmatprep.subr.mxu0 0.0
    %423 = vmatpush2.msra.mxu0 0.0
    %424 = vmatprep.subr.mxu0 0.0
    %425 = vmatpush2.msra.mxu0 0.0
    %426 = vmatprep.subr.mxu0 0.0
    %427 = vmatpush2.msra.mxu0 0.0
    %428 = vmatprep.subr.mxu0 0.0
    %429 = vmatpush2.msra.mxu0 0.0
    %430 = vmatprep.subr.mxu0 0.0
    %431 = vmatpush2.msra.mxu0 0.0
    %432 = vmatprep.subr.mxu0 0.0
    %433 = vmatpush2.msra.mxu0 0.0
    %434 = vmatprep.subr.mxu0 0.0
    %435 = vmatpush2.msra.mxu0 0.0
    %436 = vmatprep.subr.mxu0 0.0
    %437 = vmatpush2.msra.mxu0 0.0
    %438 = vmatprep.subr.mxu0 0.0
    %439 = vmatpush2.msra.mxu0 0.0
    %440 = vmatprep.subr.mxu0 0.0
    %441 = vmatpush2.msra.mxu0 0.0
    %442 = vmatprep.subr.mxu0 0.0
    %443 = vmatpush2.msra.mxu0 0.0
    %444 = vmatprep.subr.mxu0 0.0
    %445 = vmatpush2.msra.mxu0 0.0
    %446 = vmatprep.subr.mxu0 0.0
    %447 = vmatpush2.msra.mxu0 0.0
    %448 = vmatprep.subr.mxu0 0.0
    %449 = vmatpush2.msra.mxu0 0.0
    %450 = vmatprep.subr.mxu0 0.0
    %451 = vmatpush2.msra.mxu0 0.0
    %452 = vmatprep.subr.mxu0 0.0
    %453 = vmatpush2.msra.mxu0 0.0
    %454 = vmatprep.mubr.f32.mxu0 0.0
    %455 = vmatmul.mubr.f32.gmra.mxu0 %v388
    %v456 = vpop.f32.mrf.mxu0
    %v457 = vadd.f32 0.0, %v456
    %v458 = vpop.f32.mrf.mxu0
    %459 = vdwg.mxu0
    %v460 = vmax.f32 %v457, 0.0
    %vm461 = vcmask 15360
    %v463 = vsel %vm461, %v460, 0
    %vm465 = vcmask 1041408
    %v467 = vsel %vm465, %v385, 0
    %469 = vmatprep.subr.mxu0 0.0
    %470 = vmatpush1.msra.mxu0 0.0
    %471 = vmatprep.subr.mxu0 0.0
    %472 = vmatpush1.msra.mxu0 0.0
    %473 = vmatprep.subr.mxu0 0.0
    %474 = vmatpush1.msra.mxu0 0.0
    %475 = vmatprep.subr.mxu0 0.0
    %476 = vmatpush1.msra.mxu0 0.0
    %477 = vmatprep.subr.mxu0 0.0
    %478 = vmatpush1.msra.mxu0 0.0
    %479 = vmatprep.subr.mxu0 0.0
    %480 = vmatpush1.msra.mxu0 0.0
    %481 = vmatprep.subr.mxu0 0.0
    %482 = vmatpush1.msra.mxu0 0.0
    %483 = vmatprep.subr.mxu0 0.0
    %484 = vmatpush1.msra.mxu0 0.0
    %485 = vmatprep.subr.mxu0 0.0
    %486 = vmatpush1.msra.mxu0 0.0
    %487 = vmatprep.subr.mxu0 0.0
    %488 = vmatpush1.msra.mxu0 0.0
    %489 = vmatprep.subr.mxu0 0.0
    %490 = vmatpush1.msra.mxu0 0.0
    %491 = vmatprep.subr.mxu0 0.0
    %492 = vmatpush1.msra.mxu0 0.0
    %493 = vmatprep.subr.mxu0 0.0
    %494 = vmatpush1.msra.mxu0 0.0
    %495 = vmatprep.subr.mxu0 0.0
    %496 = vmatpush1.msra.mxu0 0.0
    %497 = vmatprep.subr.mxu0 0.0
    %498 = vmatpush1.msra.mxu0 0.0
    %499 = vmatprep.subr.mxu0 0.0
    %500 = vmatpush1.msra.mxu0 %v467
    %501 = vmatprep.subr.mxu0 0.0
    %502 = vmatpush2.msra.mxu0 0.0
    %503 = vmatprep.subr.mxu0 0.0
    %504 = vmatpush2.msra.mxu0 0.0
    %505 = vmatprep.subr.mxu0 0.0
    %506 = vmatpush2.msra.mxu0 0.0
    %507 = vmatprep.subr.mxu0 0.0
    %508 = vmatpush2.msra.mxu0 0.0
    %509 = vmatprep.subr.mxu0 0.0
    %510 = vmatpush2.msra.mxu0 0.0
    %511 = vmatprep.subr.mxu0 0.0
    %512 = vmatpush2.msra.mxu0 0.0
    %513 = vmatprep.subr.mxu0 0.0
    %514 = vmatpush2.msra.mxu0 0.0
    %515 = vmatprep.subr.mxu0 0.0
    %516 = vmatpush2.msra.mxu0 0.0
    %517 = vmatprep.subr.mxu0 0.0
    %518 = vmatpush2.msra.mxu0 0.0
    %519 = vmatprep.subr.mxu0 0.0
    %520 = vmatpush2.msra.mxu0 0.0
    %521 = vmatprep.subr.mxu0 0.0
    %522 = vmatpush2.msra.mxu0 0.0
    %523 = vmatprep.subr.mxu0 0.0
    %524 = vmatpush2.msra.mxu0 0.0
    %525 = vmatprep.subr.mxu0 0.0
    %526 = vmatpush2.msra.mxu0 0.0
    %527 = vmatprep.subr.mxu0 0.0
    %528 = vmatpush2.msra.mxu0 0.0
    %529 = vmatprep.subr.mxu0 0.0
    %530 = vmatpush2.msra.mxu0 0.0
    %531 = vmatprep.subr.mxu0 0.0
    %532 = vmatpush2.msra.mxu0 0.0
    %533 = vmatprep.mubr.f32.mxu0 0.0
    %534 = vmatmul.mubr.f32.gmra.mxu0 %v463
    %v535 = vpop.f32.mrf.mxu0
    %v536 = vadd.f32 0.0, %v535
    %v537 = vpop.f32.mrf.mxu0
    %538 = vdwg.mxu0
    %v539 = vxor.u32 %v536, 2147483648
    %v540 = vmul.f32 %v539, 1.442695
    %v541 = vpow.pop %v540
    %v542 = vadd.f32 %v541, 1.0
    %v543 = vrcp.pop %v542
    %v544 = vmul.f32 1.0, %v543
    %v546 = vrot.slane %v544, 4
    %v548 = vadd.f32 %v544, %v546
    %v549 = vlaneseq
    %v550 = vshrl.u32 %v549, 7
    %v551 = vsub.s32 0, %v550
    %v552 = vrot.slane %v548, %v551
    %554 = vbcast.lane.b32.xlu0 %v552, 256
    %v555 = vpop.permute.xlu0 %554
    %s557 = sor.u32 256, 8
    %558 = vbcast.lane.b32.xlu0 %v552, %s557
    %v559 = vpop.permute.xlu0 %558
    %s561 = sor.u32 256, 16
    %562 = vbcast.lane.b32.xlu0 %v552, %s561
    %v563 = vpop.permute.xlu0 %562
    %s565 = sor.u32 256, 24
    %566 = vbcast.lane.b32.xlu0 %v552, %s565
    %v567 = vpop.permute.xlu0 %566
    %v568 = vlaneseq
    %v569 = vshrl.u32 %v568, 7
    %v570 = vsub.s32 1, %v569
    %v571 = vrot.slane %v548, %v570
    %573 = vbcast.lane.b32.xlu0 %v571, 256
    %v574 = vpop.permute.xlu0 %573
    %s576 = sor.u32 256, 8
    %577 = vbcast.lane.b32.xlu0 %v571, %s576
    %v578 = vpop.permute.xlu0 %577
    %s580 = sor.u32 256, 16
    %581 = vbcast.lane.b32.xlu0 %v571, %s580
    %v582 = vpop.permute.xlu0 %581
    %s584 = sor.u32 256, 24
    %585 = vbcast.lane.b32.xlu0 %v571, %s584
    %v586 = vpop.permute.xlu0 %585
    %v587 = vlaneseq
    %v588 = vshrl.u32 %v587, 7
    %v589 = vsub.s32 2, %v588
    %v590 = vrot.slane %v548, %v589
    %592 = vbcast.lane.b32.xlu0 %v590, 256
    %v593 = vpop.permute.xlu0 %592
    %s595 = sor.u32 256, 8
    %596 = vbcast.lane.b32.xlu0 %v590, %s595
    %v597 = vpop.permute.xlu0 %596
    %s599 = sor.u32 256, 16
    %600 = vbcast.lane.b32.xlu0 %v590, %s599
    %v601 = vpop.permute.xlu0 %600
    %s603 = sor.u32 256, 24
    %604 = vbcast.lane.b32.xlu0 %v590, %s603
    %v605 = vpop.permute.xlu0 %604
    %v606 = vlaneseq
    %v607 = vshrl.u32 %v606, 7
    %v608 = vsub.s32 3, %v607
    %v609 = vrot.slane %v548, %v608
    %611 = vbcast.lane.b32.xlu0 %v609, 256
    %v612 = vpop.permute.xlu0 %611
    %s614 = sor.u32 256, 8
    %615 = vbcast.lane.b32.xlu0 %v609, %s614
    %v616 = vpop.permute.xlu0 %615
    %s618 = sor.u32 256, 16
    %619 = vbcast.lane.b32.xlu0 %v609, %s618
    %v620 = vpop.permute.xlu0 %619
    %s622 = sor.u32 256, 24
    %623 = vbcast.lane.b32.xlu0 %v609, %s622
    %v624 = vpop.permute.xlu0 %623
    %v625 = vmul.f32 %v555, %v29
    %v626 = vmul.f32 %v555, %v30
    %v627 = vmul.f32 %v559, %v31
    %v628 = vmul.f32 %v559, %v32
    %v629 = vmul.f32 %v563, %v33
    %v630 = vmul.f32 %v563, %v34
    %v631 = vmul.f32 %v567, %v35
    %v632 = vmul.f32 %v567, %v36
    %v633 = vmul.f32 %v574, %v37
    %v634 = vmul.f32 %v574, %v38
    %v635 = vmul.f32 %v578, %v39
    %v636 = vmul.f32 %v578, %v40
    %v637 = vmul.f32 %v582, %v41
    %v638 = vmul.f32 %v582, %v42
    %v639 = vmul.f32 %v586, %v43
    %v640 = vmul.f32 %v586, %v44
    %v641 = vmul.f32 %v593, %v45
    %v642 = vmul.f32 %v593, %v46
    %v643 = vmul.f32 %v597, %v47
    %v644 = vmul.f32 %v597, %v48
    %v645 = vmul.f32 %v601, %v49
    %v646 = vmul.f32 %v601, %v50
    %v647 = vmul.f32 %v605, %v51
    %v648 = vmul.f32 %v605, %v52
    %v649 = vmul.f32 %v612, %v53
    %v650 = vmul.f32 %v612, %v54
    %v651 = vmul.f32 %v616, %v55
    %v652 = vmul.f32 %v616, %v56
    %v653 = vmul.f32 %v620, %v57
    %v654 = vmul.f32 %v620, %v58
    %v655 = vmul.f32 %v624, %v59
    %v656 = vmul.f32 %v624, %v60
    %657 = vst [vmem:[#allocation5] sm:$0xff] %v625
    %658 = vst [vmem:[#allocation5 + $0x8] sm:$0xff] %v626
    %659 = vst [vmem:[#allocation5 + $0x10] sm:$0xff] %v627
    %660 = vst [vmem:[#allocation5 + $0x18] sm:$0xff] %v628
    %661 = vst [vmem:[#allocation5 + $0x20] sm:$0xff] %v629
    %662 = vst [vmem:[#allocation5 + $0x28] sm:$0xff] %v630
    %663 = vst [vmem:[#allocation5 + $0x30] sm:$0xff] %v631
    %664 = vst [vmem:[#allocation5 + $0x38] sm:$0xff] %v632
    %665 = vst [vmem:[#allocation5 + $0x40] sm:$0xff] %v633
    %666 = vst [vmem:[#allocation5 + $0x48] sm:$0xff] %v634
    %667 = vst [vmem:[#allocation5 + $0x50] sm:$0xff] %v635
    %668 = vst [vmem:[#allocation5 + $0x58] sm:$0xff] %v636
    %669 = vst [vmem:[#allocation5 + $0x60] sm:$0xff] %v637
    %670 = vst [vmem:[#allocation5 + $0x68] sm:$0xff] %v638
    %671 = vst [vmem:[#allocation5 + $0x70] sm:$0xff] %v639
    %672 = vst [vmem:[#allocation5 + $0x78] sm:$0xff] %v640
    %673 = vst [vmem:[#allocation5 + $0x80] sm:$0xff] %v641
    %674 = vst [vmem:[#allocation5 + $0x88] sm:$0xff] %v642
    %675 = vst [vmem:[#allocation5 + $0x90] sm:$0xff] %v643
    %676 = vst [vmem:[#allocation5 + $0x98] sm:$0xff] %v644
    %677 = vst [vmem:[#allocation5 + $0xa0] sm:$0xff] %v645
    %678 = vst [vmem:[#allocation5 + $0xa8] sm:$0xff] %v646
    %679 = vst [vmem:[#allocation5 + $0xb0] sm:$0xff] %v647
    %680 = vst [vmem:[#allocation5 + $0xb8] sm:$0xff] %v648
    %681 = vst [vmem:[#allocation5 + $0xc0] sm:$0xff] %v649
    %682 = vst [vmem:[#allocation5 + $0xc8] sm:$0xff] %v650
    %683 = vst [vmem:[#allocation5 + $0xd0] sm:$0xff] %v651
    %684 = vst [vmem:[#allocation5 + $0xd8] sm:$0xff] %v652
    %685 = vst [vmem:[#allocation5 + $0xe0] sm:$0xff] %v653
    %686 = vst [vmem:[#allocation5 + $0xe8] sm:$0xff] %v654
    %687 = vst [vmem:[#allocation5 + $0xf0] sm:$0xff] %v655
    %688 = vst [vmem:[#allocation5 + $0xf8] sm:$0xff] %v656
    // Predicated region
    $region18: #{tpu_custom_call.1} parent=1 // pred_check
      _
    $region19: #{tpu_custom_call.1} parent=1 // pred_check_branch
      %690 = sbr.rel (0) target = $region21
    $region20: #{tpu_custom_call.1} parent=1 // pred_region
      %s692 = ssub.s32 4096, 4096
      %693 = vsyncadd [#allocation4], %s692
      %s694 = sshll.u32 [#allocation5], 4
      %s695 = int_to_ptr.vmem [resolvable:$true] %s694
      %700 = dma.vmem_to_hbm [thread:$0]  %s695, 4096, %s3, [#allocation4], 256, 256, 16
    $region21: #{tpu_custom_call.1} parent=1 // pred_fallthru
      _
    // Predicated region
    $region22: #{tpu_custom_call.1} parent=1 // pred_check
      _
    $region23: #{tpu_custom_call.1} parent=1 // pred_check_branch
      %702 = sbr.rel (0) target = $region25
    $region24: #{tpu_custom_call.1} parent=1 // pred_region
      %703 = dma.done [#allocation4], 4096
    $region25: #{tpu_custom_call.1} parent=1 // pred_fallthru
      _
    %704 = vsyncpa [#allocation3], 1
    %705 = vsyncpa [#allocation4], 1

</llo_original>
